<compile_context>
chip_gen: v7x
topology: tpu7x:2x2x1
jax: 0.10.0
libtpu: 0.0.40
codegen_flags: <defaults>
</compile_context>

<pallas_src>
import functools

import jax
import jax.numpy as jnp
from jax.experimental import pallas as pl
from jax.experimental.pallas import tpu as pltpu

_LANE = 128                     # lane width (fast axis)
_TILE_BYTES = 4 * 1024 * 1024   # target bytes per input tile (4 MiB)
_ACC_ROWS = 256                 # f32 accumulator rows (256*128*4 B = 128 KiB)


def _cdiv(a: int, b: int) -> int:
    return -(-a // b)


def _num_tensorcores() -> int:
    """2 on multi-TensorCore chips (v7x / v4 / v5p), else 1 (v5e / v6e)."""
    try:
        kind = jax.devices()[0].device_kind.lower()
    except Exception:
        return 1
    return 2 if any(t in kind for t in ("v7", "v4", "v5p")) else 1


def _sublane_pack(dtype) -> int:
    """Sublane packing factor: 8 for 32-bit, 16 for 16-bit, 32 for 8-bit."""
    return max(8, 32 // jnp.dtype(dtype).itemsize)


def _sq_err_kernel(x_ref, y_ref, o_ref, acc_ref, *, n_true, steps, tm,
                   acc_rows, groups):
    """Partial sum of squared differences for one parallel slice.

    x_ref, y_ref : (tm, 128) VMEM tiles of the flattened inputs (native dtype)
    o_ref        : (1, 1) SMEM partial-sum output for this slice
    acc_ref      : (acc_rows, 128) f32 VMEM accumulator (tile-size independent)
    """
    i = pl.program_id(0)
    j = pl.program_id(1)

    @pl.when(j == 0)
    def _():
        acc_ref[...] = jnp.zeros_like(acc_ref)

    d = x_ref[...].astype(jnp.float32) - y_ref[...].astype(jnp.float32)
    sq = d * d

    def fold_add(vals):
        # Fold the (tm, 128) tile onto the fixed-size accumulator with pure
        # VPU adds (sublane-group reshape is layout-preserving, no XLU).
        if groups > 1:
            vals = vals.reshape(groups, acc_rows, _LANE).sum(axis=0)
        acc_ref[...] += vals

    # Global start row this grid step is logically responsible for.  For
    # clamped/duplicate blocks this is past the valid data, so they mask to 0.
    row0 = (i * steps + j) * tm
    n_full_rows = n_true // _LANE    # rows that are entirely valid

    @pl.when(row0 + tm <= n_full_rows)
    def _():                         # fully in-bounds tile: no masking needed
        fold_add(sq)

    @pl.when(row0 + tm > n_full_rows)
    def _():                         # boundary / duplicate tile: mask tail
        r_iota = jax.lax.broadcasted_iota(jnp.int32, (tm, _LANE), 0)
        l_iota = jax.lax.broadcasted_iota(jnp.int32, (tm, _LANE), 1)
        idx = (row0 + r_iota) * _LANE + l_iota
        fold_add(jnp.where(idx < n_true, sq, 0.0))

    @pl.when(j == pl.num_programs(1) - 1)
    def _():                         # one XLU full-reduce per slice
        o_ref[0, 0] = jnp.sum(acc_ref[...])


def custom_loss(inputs: jax.Array, target: jax.Array) -> jax.Array:
    """Pallas TPU implementation of the (placeholder) CustomLoss forward.

    Computes mean((inputs - target)^2) over all elements as a float32 scalar.
    """
    assert inputs.shape == target.shape, "input/target shape mismatch"

    n_true = int(inputs.size)
    if n_true == 0:
        # TODO(synk): torch's 'mean' reduction over an empty tensor is NaN.
        return jnp.float32(0.0)

    in_itemsize = jnp.dtype(inputs.dtype).itemsize
    tg_itemsize = jnp.dtype(target.dtype).itemsize
    itemsize = max(in_itemsize, tg_itemsize)
    pack = max(_sublane_pack(inputs.dtype), _sublane_pack(target.dtype))

    # ---- tiling plan: lane-dense (rows, 128) view, streamed in big tiles ---
    rows = _cdiv(n_true, _LANE)
    split = _num_tensorcores()
    rows_per_split = _cdiv(rows, split)

    tm_cap = max(pack, _TILE_BYTES // (_LANE * itemsize))
    tm = min(_cdiv(rows_per_split, pack) * pack, tm_cap)
    if tm > rows:
        tm = rows                     # single block == full dim (always legal)
    if tm >= _ACC_ROWS:
        tm = (tm // _ACC_ROWS) * _ACC_ROWS   # keep tm a multiple of acc_rows
        acc_rows = _ACC_ROWS
    else:
        acc_rows = tm                 # tiny input: accumulator == tile
    groups = tm // acc_rows

    total_blocks = _cdiv(rows, tm)
    steps = _cdiv(total_blocks, split)

    # ---- present inputs as (rows, 128) without copying the data -----------
    x = inputs.reshape(-1)
    y = target.reshape(-1)
    pad = rows * _LANE - n_true
    if pad:
        # < 128 elements, only to make the reshape legal; padded values are
        # never used (kernel masks idx >= n_true).  allow_input_fusion lets
        # XLA fuse this pad into the operand instead of materializing copies.
        x = jnp.pad(x, (0, pad))
        y = jnp.pad(y, (0, pad))
    x2d = x.reshape(rows, _LANE)
    y2d = y.reshape(rows, _LANE)

    def in_index_map(i, j):
        # Clamp so a (split, steps) grid that over-covers total_blocks never
        # requests an out-of-range block; duplicated blocks contribute zero
        # because their logical row0 lies past n_true.
        return (jnp.minimum(i * steps + j, total_blocks - 1), 0)

    tile_bytes = tm * _LANE * itemsize
    vmem_limit = int(max(32 * 1024 * 1024,
                         4 * tile_bytes + acc_rows * _LANE * 4 + (8 << 20)))

    cost = pl.CostEstimate(
        flops=3 * n_true,                       # sub, mul, add per element
        transcendentals=0,
        bytes_accessed=n_true * (in_itemsize + tg_itemsize) + split * 4,
    )

    kernel = functools.partial(_sq_err_kernel, n_true=n_true, steps=steps,
                               tm=tm, acc_rows=acc_rows, groups=groups)

    partials = pl.pallas_call(
        kernel,
        out_shape=jax.ShapeDtypeStruct((split, 1), jnp.float32),
        grid_spec=pltpu.PrefetchScalarGridSpec(
            num_scalar_prefetch=0,
            grid=(split, steps),
            in_specs=[
                pl.BlockSpec((tm, _LANE), in_index_map),
                pl.BlockSpec((tm, _LANE), in_index_map),
            ],
            out_specs=pl.BlockSpec((1, 1), lambda i, j: (i, 0),
                                   memory_space=pltpu.SMEM),
            scratch_shapes=[pltpu.VMEM((acc_rows, _LANE), jnp.float32)],
        ),
        compiler_params=pltpu.CompilerParams(
            dimension_semantics=("parallel", "arbitrary"),
            vmem_limit_bytes=vmem_limit,
            allow_input_fusion=[True, True] if pad else None,
        ),
        cost_estimate=cost,
    )(x2d, y2d)

    # Combine per-slice partial sums; normalize by the TRUE element count.
    return jnp.sum(partials) / jnp.float32(n_true)


if __name__ == "__main__":
    key = jax.random.PRNGKey(0)
    ks = jax.random.split(key, 6)

    # Small NCHW-style shape consistent with a typical loss over conv outputs.
    shape = (2, 4, 16, 16)  # B, C, H, W -> 2048 elements (lane-aligned path)
    x = jax.random.normal(ks[0], shape, dtype=jnp.float32)
    t = jax.random.normal(ks[1], shape, dtype=jnp.float32)
    loss = custom_loss(x, t)
    jax.block_until_ready(loss)
    ref = jnp.mean((x - t) ** 2)
    assert jnp.allclose(loss, ref, rtol=1e-5, atol=1e-6), (loss, ref)

    # Unaligned element count -> exercises minimal pad + in-kernel tail mask.
    shape2 = (3, 5, 7, 11)  # 1155 elements, not a multiple of 128
    x2 = jax.random.normal(ks[2], shape2, dtype=jnp.float32)
    t2 = jax.random.normal(ks[3], shape2, dtype=jnp.float32)
    loss2 = custom_loss(x2, t2)
    jax.block_until_ready(loss2)
    ref2 = jnp.mean((x2 - t2) ** 2)
    assert jnp.allclose(loss2, ref2, rtol=1e-5, atol=1e-6), (loss2, ref2)

    # bf16 inputs streamed natively (f32 accumulation in-kernel); large enough
    # to exercise the row-group fold onto the fixed-size accumulator.
    shape3 = (4, 16, 64, 64)
    x3 = jax.random.normal(ks[4], shape3, dtype=jnp.bfloat16)
    t3 = jax.random.normal(ks[5], shape3, dtype=jnp.bfloat16)
    loss3 = custom_loss(x3, t3)
    jax.block_until_ready(loss3)
    ref3 = jnp.mean((x3.astype(jnp.float32) - t3.astype(jnp.float32)) ** 2)
    assert jnp.allclose(loss3, ref3, rtol=1e-4, atol=1e-4), (loss3, ref3)

    print("KERNEL_OK")
</pallas_src>

<mosaic_0001>
module attributes {stable_mosaic.version = 11 : i64} {
  func.func @_sq_err_kernel(%arg0: i32, %arg1: i32, %arg2: memref<16x128xf32, #tpu.memory_space<vmem>>, %arg3: memref<16x128xf32, #tpu.memory_space<vmem>>, %arg4: memref<1x1xf32, #tpu.memory_space<smem>>, %arg5: memref<16x128xf32, #tpu.memory_space<vmem>>) attributes {dimension_semantics = [#tpu.dimension_semantics<parallel>, #tpu.dimension_semantics<arbitrary>], iteration_bounds = array<i64: 1, 1>, scalar_prefetch = 0 : i64, scratch_operands = 1 : i64, tpu.core_type = #tpu.core_type<tc>, window_params = [{transform_indices = @transform_0, window_bounds = array<i64: 16, 128>}, {transform_indices = @transform_1, window_bounds = array<i64: 16, 128>}, {transform_indices = @transform_2, window_bounds = array<i64: 1, 1>}]} {
    %c0_i32 = arith.constant 0 : i32
    %0 = arith.cmpi eq, %arg1, %c0_i32 : i32
    %1 = arith.extui %0 : i1 to i32
    %c0_i32_0 = arith.constant 0 : i32
    %2 = arith.cmpi ne, %1, %c0_i32_0 : i32
    scf.if %2 {
      %cst = arith.constant 0.000000e+00 : f32
      %21 = vector.broadcast %cst : f32 to vector<16x128xf32>
      %c0_12 = arith.constant 0 : index
      %c0_13 = arith.constant 0 : index
      %22 = vector.load %arg5[%c0_12, %c0_13] : memref<16x128xf32, #tpu.memory_space<vmem>>, vector<16x128xf32>
      tpu.vector_store %arg5[%c0_12, %c0_13], %21 {strides = array<i32>} : memref<16x128xf32, #tpu.memory_space<vmem>>, vector<16x128xf32>,
    } else {
    }
    %c0 = arith.constant 0 : index
    %c0_1 = arith.constant 0 : index
    %3 = vector.load %arg2[%c0, %c0_1] : memref<16x128xf32, #tpu.memory_space<vmem>>, vector<16x128xf32>
    %c0_2 = arith.constant 0 : index
    %c0_3 = arith.constant 0 : index
    %4 = vector.load %arg3[%c0_2, %c0_3] : memref<16x128xf32, #tpu.memory_space<vmem>>, vector<16x128xf32>
    %5 = arith.subf %3, %4 : vector<16x128xf32>
    %6 = arith.mulf %5, %5 : vector<16x128xf32>
    %c1_i32 = arith.constant 1 : i32
    %7 = arith.muli %arg0, %c1_i32 : i32
    %8 = arith.addi %7, %arg1 : i32
    %c16_i32 = arith.constant 16 : i32
    %9 = arith.muli %8, %c16_i32 : i32
    %c16_i32_4 = arith.constant 16 : i32
    %10 = arith.addi %9, %c16_i32_4 : i32
    %c16_i32_5 = arith.constant 16 : i32
    %11 = arith.cmpi sle, %10, %c16_i32_5 : i32
    %12 = arith.extui %11 : i1 to i32
    %c0_i32_6 = arith.constant 0 : i32
    %13 = arith.cmpi ne, %12, %c0_i32_6 : i32
    scf.if %13 {
      %c0_12 = arith.constant 0 : index
      %c0_13 = arith.constant 0 : index
      %21 = vector.load %arg5[%c0_12, %c0_13] : memref<16x128xf32, #tpu.memory_space<vmem>>, vector<16x128xf32>
      %22 = arith.addf %21, %6 : vector<16x128xf32>
      %c0_14 = arith.constant 0 : index
      %c0_15 = arith.constant 0 : index
      %23 = vector.load %arg5[%c0_14, %c0_15] : memref<16x128xf32, #tpu.memory_space<vmem>>, vector<16x128xf32>
      tpu.vector_store %arg5[%c0_14, %c0_15], %22 {strides = array<i32>} : memref<16x128xf32, #tpu.memory_space<vmem>>, vector<16x128xf32>,
    } else {
    }
    %c16_i32_7 = arith.constant 16 : i32
    %14 = arith.addi %9, %c16_i32_7 : i32
    %c16_i32_8 = arith.constant 16 : i32
    %15 = arith.cmpi sgt, %14, %c16_i32_8 : i32
    %16 = arith.extui %15 : i1 to i32
    %c0_i32_9 = arith.constant 0 : i32
    %17 = arith.cmpi ne, %16, %c0_i32_9 : i32
    scf.if %17 {
      %21 = tpu.iota {dimensions = array<i32: 0>} : vector<16x128xi32>
      %22 = tpu.iota {dimensions = array<i32: 1>} : vector<16x128xi32>
      %23 = vector.broadcast %9 : i32 to vector<16x128xi32>
      %24 = arith.addi %23, %21 : vector<16x128xi32>
      %c128_i32 = arith.constant 128 : i32
      %25 = vector.broadcast %c128_i32 : i32 to vector<16x128xi32>
      %26 = arith.muli %24, %25 : vector<16x128xi32>
      %27 = arith.addi %26, %22 : vector<16x128xi32>
      %c2048_i32 = arith.constant 2048 : i32
      %28 = vector.broadcast %c2048_i32 : i32 to vector<16x128xi32>
      %29 = arith.cmpi slt, %27, %28 : vector<16x128xi32>
      %cst = arith.constant 0.000000e+00 : f32
      %30 = vector.broadcast %cst : f32 to vector<16x128xf32>
      %31 = arith.select %29, %6, %30 : vector<16x128xi1>, vector<16x128xf32>
      %c0_12 = arith.constant 0 : index
      %c0_13 = arith.constant 0 : index
      %32 = vector.load %arg5[%c0_12, %c0_13] : memref<16x128xf32, #tpu.memory_space<vmem>>, vector<16x128xf32>
      %33 = arith.addf %32, %31 : vector<16x128xf32>
      %c0_14 = arith.constant 0 : index
      %c0_15 = arith.constant 0 : index
      %34 = vector.load %arg5[%c0_14, %c0_15] : memref<16x128xf32, #tpu.memory_space<vmem>>, vector<16x128xf32>
      tpu.vector_store %arg5[%c0_14, %c0_15], %33 {strides = array<i32>} : memref<16x128xf32, #tpu.memory_space<vmem>>, vector<16x128xf32>,
    } else {
    }
    %c0_i32_10 = arith.constant 0 : i32
    %18 = arith.cmpi eq, %arg1, %c0_i32_10 : i32
    %19 = arith.extui %18 : i1 to i32
    %c0_i32_11 = arith.constant 0 : i32
    %20 = arith.cmpi ne, %19, %c0_i32_11 : i32
    scf.if %20 {
      %c0_12 = arith.constant 0 : index
      %c0_13 = arith.constant 0 : index
      %21 = vector.load %arg5[%c0_12, %c0_13] : memref<16x128xf32, #tpu.memory_space<vmem>>, vector<16x128xf32>
      %22 = vector.shape_cast %21 : vector<16x128xf32> to vector<1x16x128xf32>
      %cst = arith.constant dense<0.000000e+00> : vector<1xf32>
      %23 = vector.multi_reduction <add>, %22, %cst [1, 2] : vector<1x16x128xf32> to vector<1xf32>
      %24 = vector.shape_cast %23 : vector<1xf32> to vector<1x1x1xf32>
      %25 = vector.extract %24[0, 0, 0] : f32 from vector<1x1x1xf32>
      %c0_14 = arith.constant 0 : index
      %c0_15 = arith.constant 0 : index
      %26 = memref.load %arg4[%c0_14, %c0_15] : memref<1x1xf32, #tpu.memory_space<smem>>
      memref.store %25, %arg4[%c0_14, %c0_15] : memref<1x1xf32, #tpu.memory_space<smem>>
    } else {
    }
    return
  }
  func.func @transform_0(%arg0: i32, %arg1: i32) -> (i32, i32) {
    %c1_i32 = arith.constant 1 : i32
    %0 = arith.muli %arg0, %c1_i32 : i32
    %1 = arith.addi %0, %arg1 : i32
    %c0_i32 = arith.constant 0 : i32
    %2 = arith.minsi %1, %c0_i32 : i32
    %c0_i32_0 = arith.constant 0 : i32
    %c0_i32_1 = arith.constant 0 : i32
    return %2, %c0_i32_0 : i32, i32
  }
  func.func @transform_1(%arg0: i32, %arg1: i32) -> (i32, i32) {
    %c1_i32 = arith.constant 1 : i32
    %0 = arith.muli %arg0, %c1_i32 : i32
    %1 = arith.addi %0, %arg1 : i32
    %c0_i32 = arith.constant 0 : i32
    %2 = arith.minsi %1, %c0_i32 : i32
    %c0_i32_0 = arith.constant 0 : i32
    %c0_i32_1 = arith.constant 0 : i32
    return %2, %c0_i32_0 : i32, i32
  }
  func.func @transform_2(%arg0: i32, %arg1: i32) -> (i32, i32) {
    %c0_i32 = arith.constant 0 : i32
    %c0_i32_0 = arith.constant 0 : i32
    return %arg0, %c0_i32 : i32, i32
  }
}

</mosaic_0001>

<llo_original>
// kernel: tpu_custom_call.1
$region0: #{tpu_custom_call.1}
  #allocation0 [shape = 'u32[]', space=smem, size = 0x4, offset = 0x4, fixed_abs, tag = 'smem constant byte address 0x4 - core index']
  #allocation1 [shape = 'u32[144,128]{1,0:T(1,128)}', space=vmem, size = 0x12000, scoped, tag = 'internal scratch']
  #allocation2 [shape = 'f32[16,128]{1,0:T(8,128)}', space=vmem, size = 0x2000, scoped, tag = 'scratch operand']
  %s0 = inlined_call_operand.hbm [shape: f32[16,128], index: 0, kind: input, shape index: {}]
  %s1 = inlined_call_operand.hbm [shape: f32[16,128], index: 1, kind: input, shape index: {}]
  %s2 = inlined_call_operand.hbm [shape: f32[1,1], index: 2, kind: output, shape index: {}]
  %s3 = sld [smem:[#allocation0]]
  $region42: #{tpu_custom_call.1} parent=0
    _
  %s5 = ssub.s32 1, %s3
  %s6 = scalar_select 0, %s5, %s3
  $region1: #{tpu_custom_call.1} parent=0
    #allocation3 [shape = 'u8[8192]{0}', space=vmem, size = 0x2000, scoped, tag = 'input window, operand 0, single buffered']
    #allocation4 [shape = 's32[1]{0}', space=sflag, size = 0x4, scoped, tag = 'scoped memory for tpu_custom_call.1']
    #allocation5 [shape = 's32[1]{0}', space=sflag, size = 0x4, scoped, tag = 'scoped memory for tpu_custom_call.1']
    #allocation6 [shape = 'u8[8192]{0}', space=vmem, size = 0x2000, scoped, tag = 'input window, operand 1, single buffered']
    #allocation7 [shape = 's32[1]{0}', space=sflag, size = 0x4, scoped, tag = 'scoped memory for tpu_custom_call.1']
    #allocation8 [shape = 'u8[512]{0}', space=smem, size = 0x200, scoped, tag = 'output window, operand 0, single buffered']
    %7 = vsyncpa [#allocation4], 0
    %8 = vsyncpa [#allocation7], 0
    %9 = vsyncpa [#allocation5], 0
    // Predicated region
    $region2: #{tpu_custom_call.1} parent=1 // pred_check
      _
    $region3: #{tpu_custom_call.1} parent=1 // pred_check_branch
      %11 = sbr.rel (0) target = $region5
    $region4: #{tpu_custom_call.1} parent=1 // pred_region
      %s12 = sadd.s32 0, 0
      %p13 = scmp.lt.s32.totalorder %s12, 0
      %s14 = scalar_select %p13, %s12, 0
      %s15 = smul.u32 2, %s14
      %s17 = ssub.s32 256, 256
      %18 = vsyncadd [#allocation4], %s17
      %s19 = smul.addr %s15, 128
      %s20 = scalar_lea.hbm %s0, %s19
      %s21 = sshll.u32 [#allocation3], 4
      %s22 = int_to_ptr.vmem [resolvable:$true] %s21
      %27 = dma.hbm_to_vmem [thread:$0]  %s20, 256, %s22, [#allocation4], 128, 128, 8
    $region5: #{tpu_custom_call.1} parent=1 // pred_fallthru
      _
    // Predicated region
    $region6: #{tpu_custom_call.1} parent=1 // pred_check
      _
    $region7: #{tpu_custom_call.1} parent=1 // pred_check_branch
      %29 = sbr.rel (0) target = $region9
    $region8: #{tpu_custom_call.1} parent=1 // pred_region
      %s30 = sadd.s32 0, 0
      %p31 = scmp.lt.s32.totalorder %s30, 0
      %s32 = scalar_select %p31, %s30, 0
      %s33 = smul.u32 2, %s32
      %s35 = ssub.s32 256, 256
      %36 = vsyncadd [#allocation7], %s35
      %s37 = smul.addr %s33, 128
      %s38 = scalar_lea.hbm %s1, %s37
      %s39 = sshll.u32 [#allocation6], 4
      %s40 = int_to_ptr.vmem [resolvable:$true] %s39
      %45 = dma.hbm_to_vmem [thread:$0]  %s38, 256, %s40, [#allocation7], 128, 128, 8
    $region9: #{tpu_custom_call.1} parent=1 // pred_fallthru
      _
    // Predicated region
    $region10: #{tpu_custom_call.1} parent=1 // pred_check
      _
    $region11: #{tpu_custom_call.1} parent=1 // pred_check_branch
      %47 = sbr.rel (0) target = $region13
    $region12: #{tpu_custom_call.1} parent=1 // pred_region
      %48 = dma.done [#allocation4], 256
    $region13: #{tpu_custom_call.1} parent=1 // pred_fallthru
      _
    // Predicated region
    $region14: #{tpu_custom_call.1} parent=1 // pred_check
      _
    $region15: #{tpu_custom_call.1} parent=1 // pred_check_branch
      %50 = sbr.rel (0) target = $region17
    $region16: #{tpu_custom_call.1} parent=1 // pred_region
      %51 = dma.done [#allocation7], 256
    $region17: #{tpu_custom_call.1} parent=1 // pred_fallthru
      _
    %s52 = sadd.s32 0, 0
    %p53 = scmp.lt.s32.totalorder %s52, 0
    %s54 = scalar_select %p53, %s52, 0
    %s55 = smul.u32 2, %s54
    %s56 = sadd.s32 0, 0
    %p57 = scmp.lt.s32.totalorder %s56, 0
    %s58 = scalar_select %p57, %s56, 0
    %s59 = smul.u32 2, %s58
    %p60 = scmp.eq.s32.totalorder 0, 0
    // Predicated region
    $region18: #{tpu_custom_call.1} parent=1 // pred_check
      %p61 = pneg %p60
    $region19: #{tpu_custom_call.1} parent=1 // pred_check_branch
      %63 = sbr.rel (%p61) target = $region21
    $region20: #{tpu_custom_call.1} parent=1 // pred_region
      %64 = vst [vmem:[#allocation2] sm:$0xff] 0.0
      %65 = vst [vmem:[#allocation2 + $0x8] sm:$0xff] 0.0
    $region21: #{tpu_custom_call.1} parent=1 // pred_fallthru
      _
    %v66 = vld [vmem:[#allocation3] sm:$0xff]
    %v67 = vld [vmem:[#allocation3 + $0x8] sm:$0xff]
    %v68 = vld [vmem:[#allocation6] sm:$0xff]
    %v69 = vld [vmem:[#allocation6 + $0x8] sm:$0xff]
    %v70 = vsub.f32 %v66, %v68
    %v71 = vsub.f32 %v67, %v69
    %v72 = vmul.f32 %v70, %v70
    %v73 = vmul.f32 %v71, %v71
    %s74 = sadd.s32 0, 0
    %s75 = smul.u32 %s74, 16
    %s76 = sadd.s32 %s75, 16
    %p77 = scmp.le.s32.totalorder %s76, 16
    // Predicated region
    $region22: #{tpu_custom_call.1} parent=1 // pred_check
      %p78 = pneg %p77
    $region23: #{tpu_custom_call.1} parent=1 // pred_check_branch
      %80 = sbr.rel (%p78) target = $region25
    $region24: #{tpu_custom_call.1} parent=1 // pred_region
      %v81 = vld [vmem:[#allocation2] sm:$0xff]
      %v82 = vld [vmem:[#allocation2 + $0x8] sm:$0xff]
      %v83 = vadd.f32 %v81, %v72
      %v84 = vadd.f32 %v82, %v73
      %85 = vst [vmem:[#allocation2] sm:$0xff] %v83
      %86 = vst [vmem:[#allocation2 + $0x8] sm:$0xff] %v84
    $region25: #{tpu_custom_call.1} parent=1 // pred_fallthru
      _
    %p87 = scmp.gt.s32.totalorder %s76, 16
    // Predicated region
    $region26: #{tpu_custom_call.1} parent=1 // pred_check
      %p88 = pneg %p87
    $region27: #{tpu_custom_call.1} parent=1 // pred_check_branch
      %90 = sbr.rel (%p88) target = $region29
    $region28: #{tpu_custom_call.1} parent=1 // pred_region
      %v91 = vlaneseq
      %v92 = vshrl.u32 %v91, 7
      %v93 = vadd.s32 %v92, 8
      %v94 = vlaneseq
      %v95 = vand.u32 %v94, 127
      %v96 = vstv %s75
      %v97 = vadd.s32 %v96, %v92
      %v98 = vadd.s32 %v96, %v93
      %v99 = vmul.u32 %v97, 128
      %v100 = vmul.u32 %v98, 128
      %v101 = vadd.s32 %v99, %v95
      %v102 = vadd.s32 %v100, %v95
      %vm103 = vcmp.lt.s32.totalorder %v101, 2048
      %vm104 = vcmp.lt.s32.totalorder %v102, 2048
      %v105 = vsel %vm103, %v72, 0.0
      %v106 = vsel %vm104, %v73, 0.0
      %v107 = vld [vmem:[#allocation2] sm:$0xff]
      %v108 = vld [vmem:[#allocation2 + $0x8] sm:$0xff]
      %v109 = vadd.f32 %v107, %v105
      %v110 = vadd.f32 %v108, %v106
      %111 = vst [vmem:[#allocation2] sm:$0xff] %v109
      %112 = vst [vmem:[#allocation2 + $0x8] sm:$0xff] %v110
    $region29: #{tpu_custom_call.1} parent=1 // pred_fallthru
      _
    // Predicated region
    $region30: #{tpu_custom_call.1} parent=1 // pred_check
      %p113 = pneg %p60
    $region31: #{tpu_custom_call.1} parent=1 // pred_check_branch
      %115 = sbr.rel (%p113) target = $region33
    $region32: #{tpu_custom_call.1} parent=1 // pred_region
      %v116 = vld [vmem:[#allocation2] sm:$0xff]
      %v117 = vld [vmem:[#allocation2 + $0x8] sm:$0xff]
      %v118 = vadd.f32 %v116, %v117
      %119 = vadd.xlane.f32.xlu0 %v118
      %v120 = vpop.xlane.xlu0 %119
      %v121 = vrot.slane %v120, 4
      %v122 = vadd.f32 %v120, %v121
      %v123 = vrot.slane %v122, 2
      %v124 = vadd.f32 %v122, %v123
      %v125 = vrot.slane %v124, 1
      %v126 = vadd.f32 %v124, %v125
      %s127 = vtos %v126
      %s128 = scalar_lea.smem [#allocation8], 0
      %129 = sst [smem:[%s128]] %s127
    $region33: #{tpu_custom_call.1} parent=1 // pred_fallthru
      _
    // Predicated region
    $region34: #{tpu_custom_call.1} parent=1 // pred_check
      _
    $region35: #{tpu_custom_call.1} parent=1 // pred_check_branch
      %131 = sbr.rel (0) target = $region37
    $region36: #{tpu_custom_call.1} parent=1 // pred_region
      %s133 = ssub.s32 16, 16
      %134 = vsyncadd [#allocation5], %s133
      %137 = dma.smem_to_hbm [#allocation8], 16, %s2, [#allocation5]
    $region37: #{tpu_custom_call.1} parent=1 // pred_fallthru
      _
    // Predicated region
    $region38: #{tpu_custom_call.1} parent=1 // pred_check
      _
    $region39: #{tpu_custom_call.1} parent=1 // pred_check_branch
      %139 = sbr.rel (0) target = $region41
    $region40: #{tpu_custom_call.1} parent=1 // pred_region
      %140 = dma.done [#allocation5], 16
    $region41: #{tpu_custom_call.1} parent=1 // pred_fallthru
      _
    %141 = sfence
    %142 = vsyncpa [#allocation4], 1
    %143 = vsyncpa [#allocation7], 1
    %144 = vsyncpa [#allocation5], 1

</llo_original>
